<compile_context>
chip_gen: v5e
topology: v5e:2x2
jax: 0.10.0
libtpu: 0.0.40
codegen_flags: <defaults>
</compile_context>

<pallas_src>
import functools

import jax
import jax.numpy as jnp
from jax.experimental import pallas as pl
from jax.experimental.pallas import tpu as pltpu

NEG_SLOPE = 0.01   # nn.LeakyReLU default
BN_EPS = 1e-5      # nn.BatchNorm1d default
PAD = 128          # lane-dense width for every layer


def _encoder3_fused_kernel(x_ref, w_ref, b_ref, o_ref, *, num_layers: int):
    """Full encoder stack in one kernel.

    x_ref : (B_pad, 128)      bf16   padded input activations
    w_ref : (L, 128, 128)     bf16   per-layer folded weights (BN scale folded in, zero-padded)
    b_ref : (L, 1, 128)       f32    per-layer folded biases  (bias*scale + shift, zero-padded)
    o_ref : (B_pad, 128)      f32    padded output (lane-dense, unmasked store)
    Intermediate activations never leave vregs.
    """
    y = x_ref[...]                                   # bf16 (B_pad, 128)
    for i in range(num_layers):                      # static unroll (L = 3)
        w = w_ref[i]                                 # (128, 128) bf16
        b = b_ref[i]                                 # (1, 128)   f32
        y = jnp.dot(y, w, preferred_element_type=jnp.float32) + b   # MXU + VPU, f32 acc
        if i < num_layers - 1:
            y = jnp.maximum(y, NEG_SLOPE * y)        # LeakyReLU, single vmax
            y = y.astype(jnp.bfloat16)               # keep the MXU fed with bf16
    o_ref[...] = y.astype(o_ref.dtype)               # full-lane unmasked vst


def encoder3_forward(x, w_slab, b_slab, out_features):
    """One fused, gridless pallas_call (3 input DMAs, everything resident in VMEM)."""
    num_layers = w_slab.shape[0]
    batch, in_f = x.shape
    b_pad = ((batch + 7) // 8) * 8                   # sublane-align the batch

    x_pad = jnp.zeros((b_pad, PAD), jnp.bfloat16).at[:batch, :in_f].set(
        x.astype(jnp.bfloat16))

    kernel = functools.partial(_encoder3_fused_kernel, num_layers=num_layers)
    vmem_spec = pl.BlockSpec(memory_space=pltpu.MemorySpace.VMEM)

    flops = 2 * b_pad * PAD * PAD * num_layers
    bytes_accessed = (x_pad.size * 2 + w_slab.size * 2 + b_slab.size * 4
                      + b_pad * PAD * 4)

    out_pad = pl.pallas_call(
        kernel,
        out_shape=jax.ShapeDtypeStruct((b_pad, PAD), jnp.float32),
        in_specs=[vmem_spec, vmem_spec, vmem_spec],
        out_specs=vmem_spec,
        cost_estimate=pl.CostEstimate(
            flops=flops, transcendentals=0, bytes_accessed=bytes_accessed),
    )(x_pad, w_slab, b_slab)

    return out_pad[:batch, :out_features]            # drop batch + lane padding outside the kernel


def kaiming_uniform(key, out_features, in_features):
    """nn.init.kaiming_uniform_ (a=0): bound = sqrt(6 / fan_in), fan_in = in_features."""
    bound = jnp.sqrt(6.0 / in_features)
    # PyTorch Linear weight is (out, in); we store transposed (in, out) for x @ W.
    w_oi = jax.random.uniform(key, (out_features, in_features),
                              minval=-bound, maxval=bound, dtype=jnp.float32)
    return w_oi.T


def build_encoder3_params(key, in_shape, layers_cfg):
    """Build parameters mirroring Encoder3.__init__ + random_init.

    Returns:
      raw_params: [(W, bias(1,out), bn_scale(1,out), bn_shift(1,out)), ...]  (f32, true sizes)
      w_slab:     (L, 128, 128) bf16   W*scale, zero-padded to 128x128 per layer
      b_slab:     (L, 1, 128)   f32    bias*scale + shift, zero-padded to 128 lanes
    """
    raw_params, w_list, b_list = [], [], []
    prev = in_shape
    for name in layers_cfg:
        size = layers_cfg[name]['size']
        key, wk = jax.random.split(key)
        w = kaiming_uniform(wk, size, prev)                      # (prev, size)
        b = jnp.zeros((size,), jnp.float32)                      # random_init zeroes bias
        # BatchNorm1d at PyTorch init, eval mode: gamma=1, beta=0, mean=0, var=1
        gamma = jnp.ones((size,), jnp.float32)
        beta = jnp.zeros((size,), jnp.float32)
        running_mean = jnp.zeros((size,), jnp.float32)
        running_var = jnp.ones((size,), jnp.float32)
        scale = gamma / jnp.sqrt(running_var + BN_EPS)           # (size,)
        shift = beta - running_mean * scale                      # (size,)

        # Fold bias + BN affine into the weights, then zero-pad to 128 lanes.
        w_folded = w * scale[None, :]                            # (prev, size)
        b_folded = b * scale + shift                             # (size,)
        w_pad = jnp.zeros((PAD, PAD), jnp.float32).at[:prev, :size].set(w_folded)
        b_pad = jnp.zeros((PAD,), jnp.float32).at[:size].set(b_folded)

        raw_params.append((w, b[None, :], scale[None, :], shift[None, :]))
        w_list.append(w_pad)
        b_list.append(b_pad)
        prev = size

    w_slab = jnp.stack(w_list).astype(jnp.bfloat16)              # (L, 128, 128) bf16
    b_slab = jnp.stack(b_list)[:, None, :]                       # (L, 1, 128)   f32
    return raw_params, w_slab, b_slab


if __name__ == "__main__":
    key = jax.random.PRNGKey(0)
    key, xk, pk = jax.random.split(key, 3)

    batch = 8
    in_shape = 32
    layers_cfg = {
        'layer1': {'size': 64, 'dropout': 0.2},
        'layer2': {'size': 32, 'dropout': 0.2},
        'output': {'size': 16},
    }
    out_features = layers_cfg['output']['size']

    x = jax.random.normal(xk, (batch, in_shape), dtype=jnp.float32)
    raw_params, w_slab, b_slab = build_encoder3_params(pk, in_shape, layers_cfg)

    out = encoder3_forward(x, w_slab, b_slab, out_features)
    jax.block_until_ready(out)

    # Pure-JAX f32 reference using the UNFOLDED per-layer params
    # (linear -> BN affine -> LeakyReLU).  Validates fusion, folding, and 128-lane padding.
    def ref_forward(x, params):
        n = len(params)
        for i, (w, b, scale, shift) in enumerate(params):
            y = x @ w + b
            y = y * scale + shift
            if i < n - 1:
                y = jnp.where(y >= 0, y, NEG_SLOPE * y)
            x = y
        return x

    ref = ref_forward(x, raw_params)
    assert out.shape == (batch, out_features)
    # bf16 weights/activations are a deliberate precision trade -> loosened tolerance.
    assert jnp.allclose(out, ref, atol=5e-2, rtol=5e-2), float(jnp.max(jnp.abs(out - ref)))

    print("KERNEL_OK")
</pallas_src>

<mosaic_0001>
module attributes {stable_mosaic.version = 11 : i64} {
  func.func @_encoder3_fused_kernel(%arg0: memref<8x128xbf16, #tpu.memory_space<vmem>>, %arg1: memref<3x128x128xbf16, #tpu.memory_space<vmem>>, %arg2: memref<3x1x128xf32, #tpu.memory_space<vmem>>, %arg3: memref<8x128xf32, #tpu.memory_space<vmem>>) attributes {dimension_semantics = [], scalar_prefetch = 0 : i64, scratch_operands = 0 : i64, tpu.core_type = #tpu.core_type<tc>} {
    %c0 = arith.constant 0 : index
    %c0_0 = arith.constant 0 : index
    %0 = vector.load %arg0[%c0, %c0_0] : memref<8x128xbf16, #tpu.memory_space<vmem>>, vector<8x128xbf16>
    %c0_1 = arith.constant 0 : index
    %c0_2 = arith.constant 0 : index
    %c0_3 = arith.constant 0 : index
    %1 = vector.load %arg1[%c0_1, %c0_2, %c0_3] : memref<3x128x128xbf16, #tpu.memory_space<vmem>>, vector<1x128x128xbf16>
    %2 = vector.shape_cast %1 : vector<1x128x128xbf16> to vector<128x128xbf16>
    %c0_4 = arith.constant 0 : index
    %c0_5 = arith.constant 0 : index
    %c0_6 = arith.constant 0 : index
    %3 = vector.load %arg2[%c0_4, %c0_5, %c0_6] : memref<3x1x128xf32, #tpu.memory_space<vmem>>, vector<1x1x128xf32>
    %4 = vector.shape_cast %3 : vector<1x1x128xf32> to vector<1x128xf32>
    %cst = arith.constant dense<0.000000e+00> : vector<8x128xf32>
    %5 = tpu.matmul %0, %2, %cst {dimension_numbers = #tpu.dot_dimension_numbers<[1], [0], [0], [1], [0, 0, 1, 1], [], []>} : vector<8x128xbf16>, vector<128x128xbf16>, vector<8x128xf32> -> vector<8x128xf32>
    %6 = vector.broadcast %4 : vector<1x128xf32> to vector<8x128xf32>
    %7 = arith.addf %5, %6 : vector<8x128xf32>
    %cst_7 = arith.constant 0.00999999977 : f32
    %8 = vector.broadcast %cst_7 : f32 to vector<8x128xf32>
    %9 = arith.mulf %8, %7 : vector<8x128xf32>
    %10 = arith.maximumf %7, %9 : vector<8x128xf32>
    %11 = arith.truncf %10 : vector<8x128xf32> to vector<8x128xbf16>
    %c1 = arith.constant 1 : index
    %c0_8 = arith.constant 0 : index
    %c0_9 = arith.constant 0 : index
    %12 = vector.load %arg1[%c1, %c0_8, %c0_9] : memref<3x128x128xbf16, #tpu.memory_space<vmem>>, vector<1x128x128xbf16>
    %13 = vector.shape_cast %12 : vector<1x128x128xbf16> to vector<128x128xbf16>
    %c1_10 = arith.constant 1 : index
    %c0_11 = arith.constant 0 : index
    %c0_12 = arith.constant 0 : index
    %14 = vector.load %arg2[%c1_10, %c0_11, %c0_12] : memref<3x1x128xf32, #tpu.memory_space<vmem>>, vector<1x1x128xf32>
    %15 = vector.shape_cast %14 : vector<1x1x128xf32> to vector<1x128xf32>
    %cst_13 = arith.constant dense<0.000000e+00> : vector<8x128xf32>
    %16 = tpu.matmul %11, %13, %cst_13 {dimension_numbers = #tpu.dot_dimension_numbers<[1], [0], [0], [1], [0, 0, 1, 1], [], []>} : vector<8x128xbf16>, vector<128x128xbf16>, vector<8x128xf32> -> vector<8x128xf32>
    %17 = vector.broadcast %15 : vector<1x128xf32> to vector<8x128xf32>
    %18 = arith.addf %16, %17 : vector<8x128xf32>
    %cst_14 = arith.constant 0.00999999977 : f32
    %19 = vector.broadcast %cst_14 : f32 to vector<8x128xf32>
    %20 = arith.mulf %19, %18 : vector<8x128xf32>
    %21 = arith.maximumf %18, %20 : vector<8x128xf32>
    %22 = arith.truncf %21 : vector<8x128xf32> to vector<8x128xbf16>
    %c2 = arith.constant 2 : index
    %c0_15 = arith.constant 0 : index
    %c0_16 = arith.constant 0 : index
    %23 = vector.load %arg1[%c2, %c0_15, %c0_16] : memref<3x128x128xbf16, #tpu.memory_space<vmem>>, vector<1x128x128xbf16>
    %24 = vector.shape_cast %23 : vector<1x128x128xbf16> to vector<128x128xbf16>
    %c2_17 = arith.constant 2 : index
    %c0_18 = arith.constant 0 : index
    %c0_19 = arith.constant 0 : index
    %25 = vector.load %arg2[%c2_17, %c0_18, %c0_19] : memref<3x1x128xf32, #tpu.memory_space<vmem>>, vector<1x1x128xf32>
    %26 = vector.shape_cast %25 : vector<1x1x128xf32> to vector<1x128xf32>
    %cst_20 = arith.constant dense<0.000000e+00> : vector<8x128xf32>
    %27 = tpu.matmul %22, %24, %cst_20 {dimension_numbers = #tpu.dot_dimension_numbers<[1], [0], [0], [1], [0, 0, 1, 1], [], []>} : vector<8x128xbf16>, vector<128x128xbf16>, vector<8x128xf32> -> vector<8x128xf32>
    %28 = vector.broadcast %26 : vector<1x128xf32> to vector<8x128xf32>
    %29 = arith.addf %27, %28 : vector<8x128xf32>
    %c0_21 = arith.constant 0 : index
    %c0_22 = arith.constant 0 : index
    %30 = vector.load %arg3[%c0_21, %c0_22] : memref<8x128xf32, #tpu.memory_space<vmem>>, vector<8x128xf32>
    tpu.vector_store %arg3[%c0_21, %c0_22], %29 {strides = array<i32>} : memref<8x128xf32, #tpu.memory_space<vmem>>, vector<8x128xf32>,
    return
  }
}

</mosaic_0001>

<llo_original>
// kernel: tpu_custom_call.1
$region0: #{tpu_custom_call.1}
  #allocation0 [shape = 'u32[]', space=smem, size = 0x4, offset = 0x4, fixed_abs, tag = 'smem constant byte address 0x4 - core index']
  #allocation1 [shape = 'u32[72,128]{1,0:T(1,128)}', space=vmem, size = 0x9000, scoped, tag = 'internal scratch']
  %s0 = inlined_call_operand.hbm [shape: bf16[8,128], index: 0, kind: input, shape index: {}]
  %s1 = inlined_call_operand.hbm [shape: bf16[3,128,128], index: 1, kind: input, shape index: {}]
  %s2 = inlined_call_operand.hbm [shape: f32[3,1,128], index: 2, kind: input, shape index: {}]
  %s3 = inlined_call_operand.hbm [shape: f32[8,128], index: 3, kind: output, shape index: {}]
  %s4 = sld [smem:[#allocation0]]
  $region34: #{tpu_custom_call.1} parent=0
    _
  %s6 = ssub.s32 1, %s4
  %s7 = scalar_select 0, %s6, %s4
  $region1: #{tpu_custom_call.1} parent=0
    #allocation2 [shape = 'u8[2048]{0}', space=vmem, size = 0x800, scoped, tag = 'input window, operand 0, single buffered']
    #allocation3 [shape = 's32[1]{0}', space=sflag, size = 0x4, scoped, tag = 'scoped memory for tpu_custom_call.1']
    #allocation4 [shape = 's32[1]{0}', space=sflag, size = 0x4, scoped, tag = 'scoped memory for tpu_custom_call.1']
    #allocation5 [shape = 'u8[98304]{0}', space=vmem, size = 0x18000, scoped, tag = 'input window, operand 1, single buffered']
    #allocation6 [shape = 's32[1]{0}', space=sflag, size = 0x4, scoped, tag = 'scoped memory for tpu_custom_call.1']
    #allocation7 [shape = 'u8[1536]{0}', space=vmem, size = 0x800, scoped, tag = 'input window, operand 2, single buffered']
    #allocation8 [shape = 'u8[4096]{0}', space=vmem, size = 0x1000, scoped, tag = 'output window, operand 0, single buffered']
    %8 = vsyncpa [#allocation3], 0
    %9 = vsyncpa [#allocation6], 0
    %10 = vsyncpa [#allocation4], 0
    // Predicated region
    $region2: #{tpu_custom_call.1} parent=1 // pred_check
      _
    $region3: #{tpu_custom_call.1} parent=1 // pred_check_branch
      %12 = sbr.rel (0) target = $region5
    $region4: #{tpu_custom_call.1} parent=1 // pred_region
      %14 = vsyncadd [#allocation3], 0
      %s16 = sshll.u32 %s0, 4
      %s17 = int_to_ptr.hbm [resolvable:$true] %s16
      %s18 = sshll.u32 [#allocation2], 4
      %s19 = int_to_ptr.vmem [resolvable:$true] %s18
      %21 = dma.hbm_to_vmem [thread:$0]  %s17, 64, %s19, [#allocation3]
    $region5: #{tpu_custom_call.1} parent=1 // pred_fallthru
      _
    // Predicated region
    $region6: #{tpu_custom_call.1} parent=1 // pred_check
      _
    $region7: #{tpu_custom_call.1} parent=1 // pred_check_branch
      %23 = sbr.rel (0) target = $region9
    $region8: #{tpu_custom_call.1} parent=1 // pred_region
      %25 = vsyncadd [#allocation6], 0
      %s26 = sshll.u32 %s1, 4
      %s27 = int_to_ptr.hbm [resolvable:$true] %s26
      %s28 = sshll.u32 [#allocation5], 4
      %s29 = int_to_ptr.vmem [resolvable:$true] %s28
      %34 = dma.hbm_to_vmem [thread:$0]  %s27, 3072, %s29, [#allocation6], 64, 64, 4
    $region9: #{tpu_custom_call.1} parent=1 // pred_fallthru
      _
    // Predicated region
    $region10: #{tpu_custom_call.1} parent=1 // pred_check
      _
    $region11: #{tpu_custom_call.1} parent=1 // pred_check_branch
      %36 = sbr.rel (0) target = $region13
    $region12: #{tpu_custom_call.1} parent=1 // pred_region
      %38 = vsyncadd [#allocation6], 0
      %s39 = sshll.u32 %s2, 4
      %s40 = int_to_ptr.hbm [resolvable:$true] %s39
      %s41 = sshll.u32 [#allocation7], 4
      %s42 = int_to_ptr.vmem [resolvable:$true] %s41
      %47 = dma.hbm_to_vmem [thread:$0]  %s40, 48, %s42, [#allocation6], 16, 16, 1
    $region13: #{tpu_custom_call.1} parent=1 // pred_fallthru
      _
    // Predicated region
    $region14: #{tpu_custom_call.1} parent=1 // pred_check
      _
    $region15: #{tpu_custom_call.1} parent=1 // pred_check_branch
      %49 = sbr.rel (0) target = $region17
    $region16: #{tpu_custom_call.1} parent=1 // pred_region
      %51 = dma.done [#allocation3], 64
    $region17: #{tpu_custom_call.1} parent=1 // pred_fallthru
      _
    // Predicated region
    $region18: #{tpu_custom_call.1} parent=1 // pred_check
      _
    $region19: #{tpu_custom_call.1} parent=1 // pred_check_branch
      %53 = sbr.rel (0) target = $region21
    $region20: #{tpu_custom_call.1} parent=1 // pred_region
      %55 = dma.done [#allocation6], 3072
    $region21: #{tpu_custom_call.1} parent=1 // pred_fallthru
      _
    // Predicated region
    $region22: #{tpu_custom_call.1} parent=1 // pred_check
      _
    $region23: #{tpu_custom_call.1} parent=1 // pred_check_branch
      %57 = sbr.rel (0) target = $region25
    $region24: #{tpu_custom_call.1} parent=1 // pred_region
      %59 = dma.done [#allocation6], 48
    $region25: #{tpu_custom_call.1} parent=1 // pred_fallthru
      _
    %v60 = vld [vmem:[#allocation2] sm:$0xf]
    %v61 = vld [vmem:[#allocation5] sm:$0xf]
    %v62 = vld [vmem:[#allocation5 + $0x4] sm:$0xf]
    %v63 = vld [vmem:[#allocation5 + $0x8] sm:$0xf]
    %v64 = vld [vmem:[#allocation5 + $0xc] sm:$0xf]
    %v65 = vld [vmem:[#allocation5 + $0x10] sm:$0xf]
    %v66 = vld [vmem:[#allocation5 + $0x14] sm:$0xf]
    %v67 = vld [vmem:[#allocation5 + $0x18] sm:$0xf]
    %v68 = vld [vmem:[#allocation5 + $0x1c] sm:$0xf]
    %v69 = vld [vmem:[#allocation5 + $0x20] sm:$0xf]
    %v70 = vld [vmem:[#allocation5 + $0x24] sm:$0xf]
    %v71 = vld [vmem:[#allocation5 + $0x28] sm:$0xf]
    %v72 = vld [vmem:[#allocation5 + $0x2c] sm:$0xf]
    %v73 = vld [vmem:[#allocation5 + $0x30] sm:$0xf]
    %v74 = vld [vmem:[#allocation5 + $0x34] sm:$0xf]
    %v75 = vld [vmem:[#allocation5 + $0x38] sm:$0xf]
    %v76 = vld [vmem:[#allocation5 + $0x3c] sm:$0xf]
    %v77 = vld [vmem:[#allocation7] sm:$0x1]
    %v79 = vperm.slane %v77, 0
    %v97 = vunpack.c.l.b16 %v61
    %v98 = vunpack.c.l.b16 %v62
    %v99 = vunpack.c.l.b16 %v63
    %v100 = vunpack.c.l.b16 %v64
    %v101 = vunpack.c.l.b16 %v65
    %v102 = vunpack.c.l.b16 %v66
    %v103 = vunpack.c.l.b16 %v67
    %v104 = vunpack.c.l.b16 %v68
    %v105 = vunpack.c.l.b16 %v69
    %v106 = vunpack.c.l.b16 %v70
    %v107 = vunpack.c.l.b16 %v71
    %v108 = vunpack.c.l.b16 %v72
    %v109 = vunpack.c.l.b16 %v73
    %v110 = vunpack.c.l.b16 %v74
    %v111 = vunpack.c.l.b16 %v75
    %v112 = vunpack.c.l.b16 %v76
    %v113 = vpack.c.b16 %v98, %v97
    %v114 = vpack.c.b16 %v100, %v99
    %v115 = vpack.c.b16 %v102, %v101
    %v116 = vpack.c.b16 %v104, %v103
    %v117 = vpack.c.b16 %v106, %v105
    %v118 = vpack.c.b16 %v108, %v107
    %v119 = vpack.c.b16 %v110, %v109
    %v120 = vpack.c.b16 %v112, %v111
    %129 = vmatpush.bf16.msra.mxu0 %v120
    %130 = vmatpush.bf16.msra.mxu0 %v119
    %131 = vmatpush.bf16.msra.mxu0 %v118
    %132 = vmatpush.bf16.msra.mxu0 %v117
    %133 = vmatpush.bf16.msra.mxu0 %v116
    %134 = vmatpush.bf16.msra.mxu0 %v115
    %135 = vmatpush.bf16.msra.mxu0 %v114
    %136 = vmatpush.bf16.msra.mxu0 %v113
    %137 = vmatmul.bf16.gmra.mxu0 %v60
    %v138 = vpop.f32.mrf.mxu0
    %v139 = vadd.f32 %v79, %v138
    %v140 = vpop.f32.mrf.mxu0
    %141 = vdwg.mxu0
    %v142 = vmul.f32 %v139, 0.01
    %v143 = vmax.f32 %v139, %v142
    %v144 = vpack.c.bf16 %v143, %v143
    %s145 = scalar_lea.vmem [#allocation5], 64
    %v146 = vld [vmem:[%s145] sm:$0xf]
    %v147 = vld [vmem:[%s145 + $0x4] sm:$0xf]
    %v148 = vld [vmem:[%s145 + $0x8] sm:$0xf]
    %v149 = vld [vmem:[%s145 + $0xc] sm:$0xf]
    %v150 = vld [vmem:[%s145 + $0x10] sm:$0xf]
    %v151 = vld [vmem:[%s145 + $0x14] sm:$0xf]
    %v152 = vld [vmem:[%s145 + $0x18] sm:$0xf]
    %v153 = vld [vmem:[%s145 + $0x1c] sm:$0xf]
    %v154 = vld [vmem:[%s145 + $0x20] sm:$0xf]
    %v155 = vld [vmem:[%s145 + $0x24] sm:$0xf]
    %v156 = vld [vmem:[%s145 + $0x28] sm:$0xf]
    %v157 = vld [vmem:[%s145 + $0x2c] sm:$0xf]
    %v158 = vld [vmem:[%s145 + $0x30] sm:$0xf]
    %v159 = vld [vmem:[%s145 + $0x34] sm:$0xf]
    %v160 = vld [vmem:[%s145 + $0x38] sm:$0xf]
    %v161 = vld [vmem:[%s145 + $0x3c] sm:$0xf]
    %s162 = scalar_lea.vmem [#allocation7], 1
    %v163 = vld [vmem:[%s162] sm:$0x1]
    %v165 = vperm.slane %v163, 0
    %v183 = vunpack.c.l.b16 %v146
    %v184 = vunpack.c.l.b16 %v147
    %v185 = vunpack.c.l.b16 %v148
    %v186 = vunpack.c.l.b16 %v149
    %v187 = vunpack.c.l.b16 %v150
    %v188 = vunpack.c.l.b16 %v151
    %v189 = vunpack.c.l.b16 %v152
    %v190 = vunpack.c.l.b16 %v153
    %v191 = vunpack.c.l.b16 %v154
    %v192 = vunpack.c.l.b16 %v155
    %v193 = vunpack.c.l.b16 %v156
    %v194 = vunpack.c.l.b16 %v157
    %v195 = vunpack.c.l.b16 %v158
    %v196 = vunpack.c.l.b16 %v159
    %v197 = vunpack.c.l.b16 %v160
    %v198 = vunpack.c.l.b16 %v161
    %v199 = vpack.c.b16 %v184, %v183
    %v200 = vpack.c.b16 %v186, %v185
    %v201 = vpack.c.b16 %v188, %v187
    %v202 = vpack.c.b16 %v190, %v189
    %v203 = vpack.c.b16 %v192, %v191
    %v204 = vpack.c.b16 %v194, %v193
    %v205 = vpack.c.b16 %v196, %v195
    %v206 = vpack.c.b16 %v198, %v197
    %215 = vmatpush.bf16.msra.mxu0 %v206
    %216 = vmatpush.bf16.msra.mxu0 %v205
    %217 = vmatpush.bf16.msra.mxu0 %v204
    %218 = vmatpush.bf16.msra.mxu0 %v203
    %219 = vmatpush.bf16.msra.mxu0 %v202
    %220 = vmatpush.bf16.msra.mxu0 %v201
    %221 = vmatpush.bf16.msra.mxu0 %v200
    %222 = vmatpush.bf16.msra.mxu0 %v199
    %223 = vmatmul.bf16.gmra.mxu0 %v144
    %v224 = vpop.f32.mrf.mxu0
    %v225 = vadd.f32 %v165, %v224
    %v226 = vpop.f32.mrf.mxu0
    %227 = vdwg.mxu0
    %v228 = vmul.f32 %v225, 0.01
    %v229 = vmax.f32 %v225, %v228
    %v230 = vpack.c.bf16 %v229, %v229
    %s231 = scalar_lea.vmem [#allocation5], 128
    %v232 = vld [vmem:[%s231] sm:$0xf]
    %v233 = vld [vmem:[%s231 + $0x4] sm:$0xf]
    %v234 = vld [vmem:[%s231 + $0x8] sm:$0xf]
    %v235 = vld [vmem:[%s231 + $0xc] sm:$0xf]
    %v236 = vld [vmem:[%s231 + $0x10] sm:$0xf]
    %v237 = vld [vmem:[%s231 + $0x14] sm:$0xf]
    %v238 = vld [vmem:[%s231 + $0x18] sm:$0xf]
    %v239 = vld [vmem:[%s231 + $0x1c] sm:$0xf]
    %v240 = vld [vmem:[%s231 + $0x20] sm:$0xf]
    %v241 = vld [vmem:[%s231 + $0x24] sm:$0xf]
    %v242 = vld [vmem:[%s231 + $0x28] sm:$0xf]
    %v243 = vld [vmem:[%s231 + $0x2c] sm:$0xf]
    %v244 = vld [vmem:[%s231 + $0x30] sm:$0xf]
    %v245 = vld [vmem:[%s231 + $0x34] sm:$0xf]
    %v246 = vld [vmem:[%s231 + $0x38] sm:$0xf]
    %v247 = vld [vmem:[%s231 + $0x3c] sm:$0xf]
    %s248 = scalar_lea.vmem [#allocation7], 2
    %v249 = vld [vmem:[%s248] sm:$0x1]
    %v251 = vperm.slane %v249, 0
    %v269 = vunpack.c.l.b16 %v232
    %v270 = vunpack.c.l.b16 %v233
    %v271 = vunpack.c.l.b16 %v234
    %v272 = vunpack.c.l.b16 %v235
    %v273 = vunpack.c.l.b16 %v236
    %v274 = vunpack.c.l.b16 %v237
    %v275 = vunpack.c.l.b16 %v238
    %v276 = vunpack.c.l.b16 %v239
    %v277 = vunpack.c.l.b16 %v240
    %v278 = vunpack.c.l.b16 %v241
    %v279 = vunpack.c.l.b16 %v242
    %v280 = vunpack.c.l.b16 %v243
    %v281 = vunpack.c.l.b16 %v244
    %v282 = vunpack.c.l.b16 %v245
    %v283 = vunpack.c.l.b16 %v246
    %v284 = vunpack.c.l.b16 %v247
    %v285 = vpack.c.b16 %v270, %v269
    %v286 = vpack.c.b16 %v272, %v271
    %v287 = vpack.c.b16 %v274, %v273
    %v288 = vpack.c.b16 %v276, %v275
    %v289 = vpack.c.b16 %v278, %v277
    %v290 = vpack.c.b16 %v280, %v279
    %v291 = vpack.c.b16 %v282, %v281
    %v292 = vpack.c.b16 %v284, %v283
    %301 = vmatpush.bf16.msra.mxu0 %v292
    %302 = vmatpush.bf16.msra.mxu0 %v291
    %303 = vmatpush.bf16.msra.mxu0 %v290
    %304 = vmatpush.bf16.msra.mxu0 %v289
    %305 = vmatpush.bf16.msra.mxu0 %v288
    %306 = vmatpush.bf16.msra.mxu0 %v287
    %307 = vmatpush.bf16.msra.mxu0 %v286
    %308 = vmatpush.bf16.msra.mxu0 %v285
    %309 = vmatmul.bf16.gmra.mxu0 %v230
    %v310 = vpop.f32.mrf.mxu0
    %v311 = vadd.f32 %v251, %v310
    %v312 = vpop.f32.mrf.mxu0
    %313 = vdwg.mxu0
    %314 = vst [vmem:[#allocation8] sm:$0xff] %v311
    // Predicated region
    $region26: #{tpu_custom_call.1} parent=1 // pred_check
      _
    $region27: #{tpu_custom_call.1} parent=1 // pred_check_branch
      %316 = sbr.rel (0) target = $region29
    $region28: #{tpu_custom_call.1} parent=1 // pred_region
      %318 = vsyncadd [#allocation4], 0
      %s320 = sshll.u32 [#allocation8], 4
      %s321 = int_to_ptr.vmem [resolvable:$true] %s320
      %s322 = sshll.u32 %s3, 4
      %s323 = int_to_ptr.hbm [resolvable:$true] %s322
      %325 = dma.vmem_to_hbm [thread:$0]  %s321, 128, %s323, [#allocation4]
    $region29: #{tpu_custom_call.1} parent=1 // pred_fallthru
      _
    // Predicated region
    $region30: #{tpu_custom_call.1} parent=1 // pred_check
      _
    $region31: #{tpu_custom_call.1} parent=1 // pred_check_branch
      %327 = sbr.rel (0) target = $region33
    $region32: #{tpu_custom_call.1} parent=1 // pred_region
      %329 = dma.done [#allocation4], 128
    $region33: #{tpu_custom_call.1} parent=1 // pred_fallthru
      _
    %330 = vsyncpa [#allocation3], 1
    %331 = vsyncpa [#allocation6], 1
    %332 = vsyncpa [#allocation4], 1

</llo_original>
